<compile_context>
chip_gen: v7x
topology: tpu7x:2x2x1
jax: 0.10.0
libtpu: 0.0.40
codegen_flags: <defaults>
</compile_context>

<pallas_src>
import functools

import jax
import jax.numpy as jnp
from jax import lax
from jax.experimental import pallas as pl
from jax.experimental.pallas import tpu as pltpu

EPS = 1e-5  # nn.GroupNorm default


def _round_up(v, m):
    return (v + m - 1) // m * m


def _vmem_limit_bytes():
    """Generation-aware VMEM budget for this kernel."""
    try:
        phys = int(pltpu.get_tpu_info().vmem_capacity_bytes)
    except Exception:
        phys = 64 << 20                      # conservative (v7x per-core size)
    # Leave headroom; cap at 64 MiB even on 128 MiB parts (v5e / v6e).
    return int(min((phys * 3) // 4, 64 << 20))


def _choose_hw_tile(c_eff, hw, itemsize, vmem_limit):
    """~1-2 MiB lane-dense input tiles, bounded by the VMEM budget."""
    per_tile_budget = min(2 << 20, max(vmem_limit // 12, 128 * c_eff * itemsize))
    hw_tile = (per_tile_budget // (c_eff * itemsize)) // 128 * 128
    hw_tile = max(hw_tile, 128)
    return min(hw_tile, _round_up(hw, 128))


# ---------------- fused single-pass kernel (per-sample slab resident) ---------


def _fused_kernel(x_ref, wg_ref, wgsum_ref, wb_ref, o_ref, *, inv_cnt, eps, c_real):
    xf = x_ref[...].astype(jnp.float32)                    # (C_eff, HW) resident
    mean = jnp.sum(xf) * inv_cnt
    d = xf - mean
    if c_real is not None:
        # padded-C fallback: zero-pad rows must not contribute to the variance
        row = lax.broadcasted_iota(jnp.int32, d.shape, 0)
        d = jnp.where(row < c_real, d, 0.0)
    var = jnp.sum(d * d) * inv_cnt                         # centered variance
    inv = lax.rsqrt(var + eps)

    # 1x1 conv on the MXU with gamma folded into the weight (f32 accumulate).
    y = jnp.dot(wg_ref[...], x_ref[...], preferred_element_type=jnp.float32)
    # wb - inv*mean*rowsum(Wg)  ==  W @ (beta - gamma*mean*inv) + conv_b
    shift = wb_ref[...] - (inv * mean) * wgsum_ref[...]    # (C_eff, 1)
    o_ref[...] = (inv * y + shift).astype(o_ref.dtype)


# ---------------- tiled two-pass kernels (large slabs) ------------------------


def _stats_kernel(x_ref, stat_ref, *, hw, hw_tile, mask_tail):
    t = pl.program_id(1)

    @pl.when(t == 0)
    def _():
        stat_ref[...] = jnp.zeros_like(stat_ref)

    xf = x_ref[...].astype(jnp.float32)                    # (C_eff, HW_TILE)
    if mask_tail:
        # partial last tile: lanes beyond the real HW hold unspecified data
        lane = lax.broadcasted_iota(jnp.int32, xf.shape, 1)
        xf = jnp.where(t * hw_tile + lane < hw, xf, 0.0)
    s = jnp.sum(xf)
    ss = jnp.sum(xf * xf)
    row = lax.broadcasted_iota(jnp.int32, stat_ref.shape, 0)
    stat_ref[...] += jnp.where(row == 0, s, ss)            # row0 = sum, row1 = sumsq


def _apply_kernel(stat_ref, x_ref, wg_ref, wgsum_ref, wb_ref, o_ref, *, inv_cnt, eps):
    n = pl.program_id(0)
    s = stat_ref[2 * n]                                    # SMEM scalars
    ss = stat_ref[2 * n + 1]
    mean = s * inv_cnt
    var = jnp.maximum(ss * inv_cnt - mean * mean, 0.0)
    inv = lax.rsqrt(var + eps)                             # EUP, effectively free

    y = jnp.dot(wg_ref[...], x_ref[...], preferred_element_type=jnp.float32)
    shift = wb_ref[...] - (inv * mean) * wgsum_ref[...]
    o_ref[...] = (inv * y + shift).astype(o_ref.dtype)


# ---------------- wrapper ------------------------------------------------------


def prenorm(x_nchw, gamma, beta, conv_w, conv_b, *, force_tiled=False, hw_tile=None):
    """x_nchw: (N, C, H, W); gamma/beta: (C,); conv_w: (C, C); conv_b: (C,)."""
    N, C, H, W = x_nchw.shape
    HW = H * W
    itemsize = jnp.dtype(x_nchw.dtype).itemsize
    vmem_limit = _vmem_limit_bytes()

    # Channels stay unpadded whenever C is sublane-aligned (the common case for
    # diffusion blocks); fall back to a tiny pad only for odd channel counts.
    c_eff = C if C % 8 == 0 else _round_up(C, 8)
    padded_c = c_eff != C

    x = x_nchw.reshape(N, C, HW)
    if padded_c:
        x = jnp.pad(x, ((0, 0), (0, c_eff - C), (0, 0)))

    # ---- fold GroupNorm affine into the 1x1 conv (param math in f32) ----
    w32 = conv_w.astype(jnp.float32)
    wg32 = w32 * gamma.astype(jnp.float32)[None, :]
    wgsum = jnp.sum(wg32, axis=1, keepdims=True)                        # (C, 1)
    wb = w32 @ beta.astype(jnp.float32).reshape(C, 1) \
        + conv_b.astype(jnp.float32).reshape(C, 1)                      # (C, 1)
    wg = wg32.astype(x.dtype)
    if padded_c:
        wg = jnp.pad(wg, ((0, c_eff - C), (0, c_eff - C)))
        wgsum = jnp.pad(wgsum, ((0, c_eff - C), (0, 0)))
        wb = jnp.pad(wb, ((0, c_eff - C), (0, 0)))

    inv_cnt = 1.0 / float(C * HW)                # real (unpadded) element count
    wg_bytes = c_eff * c_eff * itemsize

    # ---- fused single-pass path: one HBM read of x ----
    slab = c_eff * HW * itemsize
    slab_f32 = c_eff * HW * 4
    fused_bytes = 4 * slab + 3 * slab_f32 + wg_bytes + (1 << 20)
    use_fused = (not force_tiled) and (fused_bytes <= vmem_limit)

    if use_fused:
        out = pl.pallas_call(
            functools.partial(_fused_kernel, inv_cnt=inv_cnt, eps=EPS,
                              c_real=(C if padded_c else None)),
            out_shape=jax.ShapeDtypeStruct((N, c_eff, HW), x.dtype),
            grid_spec=pltpu.PrefetchScalarGridSpec(
                num_scalar_prefetch=0,
                grid=(N,),
                in_specs=[
                    pl.BlockSpec((pl.Squeezed(), c_eff, HW), lambda n: (n, 0, 0)),
                    pl.BlockSpec((c_eff, c_eff), lambda n: (0, 0)),
                    pl.BlockSpec((c_eff, 1), lambda n: (0, 0)),
                    pl.BlockSpec((c_eff, 1), lambda n: (0, 0)),
                ],
                out_specs=pl.BlockSpec((pl.Squeezed(), c_eff, HW),
                                       lambda n: (n, 0, 0)),
            ),
            compiler_params=pltpu.CompilerParams(
                dimension_semantics=("parallel",),
                vmem_limit_bytes=vmem_limit,
            ),
        )(x, wg, wgsum, wb)
    else:
        # ---- tiled two-pass path ----
        tile = hw_tile if hw_tile is not None else _choose_hw_tile(
            c_eff, HW, itemsize, vmem_limit)
        T = pl.cdiv(HW, tile)
        mask_tail = (HW % tile) != 0

        # Pass 1: per-sample sum / sum-of-squares over HW tiles.
        stats = pl.pallas_call(
            functools.partial(_stats_kernel, hw=HW, hw_tile=tile,
                              mask_tail=mask_tail),
            out_shape=jax.ShapeDtypeStruct((N, 2, 128), jnp.float32),
            grid_spec=pltpu.PrefetchScalarGridSpec(
                num_scalar_prefetch=0,
                grid=(N, T),
                in_specs=[
                    pl.BlockSpec((pl.Squeezed(), c_eff, tile),
                                 lambda n, t: (n, 0, t)),
                ],
                out_specs=pl.BlockSpec((pl.Squeezed(), 2, 128),
                                       lambda n, t: (n, 0, 0)),
            ),
            compiler_params=pltpu.CompilerParams(
                dimension_semantics=("parallel", "arbitrary"),
                vmem_limit_bytes=vmem_limit,
            ),
        )(x)

        # Flat (2N,) f32 vector [sum_0, sumsq_0, sum_1, sumsq_1, ...] -> 1-D SMEM
        # (mean / rsqrt are computed inside pass 2 on the EUP).
        stat_flat = stats[:, :, 0].reshape(-1)

        # Pass 2: folded normalize + 1x1 conv, lane-dense output tiles.
        out = pl.pallas_call(
            functools.partial(_apply_kernel, inv_cnt=inv_cnt, eps=EPS),
            out_shape=jax.ShapeDtypeStruct((N, c_eff, HW), x.dtype),
            grid_spec=pltpu.PrefetchScalarGridSpec(
                num_scalar_prefetch=0,
                grid=(N, T),
                in_specs=[
                    pl.BlockSpec(memory_space=pltpu.MemorySpace.SMEM),   # (2N,)
                    pl.BlockSpec((pl.Squeezed(), c_eff, tile),
                                 lambda n, t: (n, 0, t)),
                    pl.BlockSpec((c_eff, c_eff), lambda n, t: (0, 0)),
                    pl.BlockSpec((c_eff, 1), lambda n, t: (0, 0)),
                    pl.BlockSpec((c_eff, 1), lambda n, t: (0, 0)),
                ],
                out_specs=pl.BlockSpec((pl.Squeezed(), c_eff, tile),
                                       lambda n, t: (n, 0, t)),
            ),
            compiler_params=pltpu.CompilerParams(
                dimension_semantics=("parallel", "parallel"),
                vmem_limit_bytes=vmem_limit,
            ),
        )(stat_flat, x, wg, wgsum, wb)

    if padded_c:
        out = out[:, :C, :]
    return out.reshape(N, C, H, W)


def prenorm_ref(x_nchw, gamma, beta, conv_w, conv_b):
    """Pure-JAX reference mirroring torch GroupNorm(1, C) + 1x1 conv."""
    N, C, H, W = x_nchw.shape
    xf = x_nchw.reshape(N, -1).astype(jnp.float32)
    mean = xf.mean(axis=1, keepdims=True)
    var = ((xf - mean) ** 2).mean(axis=1, keepdims=True)
    xn = ((xf - mean) / jnp.sqrt(var + EPS)).reshape(N, C, H * W)
    xn = xn * gamma.reshape(1, C, 1) + beta.reshape(1, C, 1)
    y = jnp.einsum("oc,ncp->nop", conv_w.astype(jnp.float32), xn,
                   precision="highest") + conv_b.reshape(1, C, 1)
    return y.reshape(N, C, H, W)


if __name__ == "__main__":
    key = jax.random.PRNGKey(0)

    def make(C, H, W, N=2, dtype=jnp.float32):
        k_x, k_w, k_g, k_b = jax.random.split(key, 4)
        x = jax.random.normal(k_x, (N, C, H, W), dtype=jnp.float32).astype(dtype)
        gamma = 1.0 + 0.1 * jax.random.normal(k_g, (C,), dtype=jnp.float32)
        beta = 0.05 * jax.random.normal(k_b, (C,), dtype=jnp.float32)
        conv_w = 0.1 * jax.random.normal(k_w, (C, C), dtype=jnp.float32)
        conv_b = 0.01 * jnp.ones((C,), dtype=jnp.float32)
        return x, gamma, beta, conv_w, conv_b

    def check(args, tol, **kw):
        x, gamma, beta, conv_w, conv_b = args
        out = jax.block_until_ready(prenorm(x, gamma, beta, conv_w, conv_b, **kw))
        ref = prenorm_ref(x.astype(jnp.float32), gamma, beta, conv_w, conv_b)
        assert out.shape == x.shape
        err = float(jnp.max(jnp.abs(out.astype(jnp.float32) - ref)))
        assert err <= tol, (tuple(x.shape), str(x.dtype), kw, err)

    # 1) spec shape: fused path through the padded-C fallback (C % 8 != 0)
    check(make(4, 16, 16), 3e-3)
    # 2) aligned channels: fused path with NO padding / slicing anywhere
    check(make(8, 16, 16), 3e-3)
    # 3) tiled two-pass path with a partial (masked) last HW tile (HW = 576)
    check(make(8, 24, 24), 3e-3, force_tiled=True, hw_tile=128)
    # 4) bf16 activations through the fused path
    check(make(8, 16, 16, dtype=jnp.bfloat16), 3e-2)

    print("KERNEL_OK")
</pallas_src>

<mosaic_0001>
module attributes {stable_mosaic.version = 11 : i64} {
  func.func @_fused_kernel(%arg0: i32, %arg1: memref<1x8x256xf32, #tpu.memory_space<vmem>>, %arg2: memref<8x8xf32, #tpu.memory_space<vmem>>, %arg3: memref<8x1xf32, #tpu.memory_space<vmem>>, %arg4: memref<8x1xf32, #tpu.memory_space<vmem>>, %arg5: memref<1x8x256xf32, #tpu.memory_space<vmem>>) attributes {dimension_semantics = [#tpu.dimension_semantics<parallel>], iteration_bounds = array<i64: 2>, scalar_prefetch = 0 : i64, scratch_operands = 0 : i64, tpu.core_type = #tpu.core_type<tc>, window_params = [{transform_indices = @transform_0, window_bounds = array<i64: 1, 8, 256>}, {pipeline_mode = #tpu.pipeline_mode<synchronous>, transform_indices = @transform_1, window_bounds = array<i64: 8, 8>}, {pipeline_mode = #tpu.pipeline_mode<synchronous>, transform_indices = @transform_2, window_bounds = array<i64: 8, 1>}, {pipeline_mode = #tpu.pipeline_mode<synchronous>, transform_indices = @transform_3, window_bounds = array<i64: 8, 1>}, {transform_indices = @transform_4, window_bounds = array<i64: 1, 8, 256>}]} {
    %c0 = arith.constant 0 : index
    %c0_0 = arith.constant 0 : index
    %c0_1 = arith.constant 0 : index
    %0 = vector.load %arg1[%c0, %c0_0, %c0_1] : memref<1x8x256xf32, #tpu.memory_space<vmem>>, vector<1x8x256xf32>
    %1 = vector.shape_cast %0 : vector<1x8x256xf32> to vector<8x256xf32>
    %2 = vector.shape_cast %1 : vector<8x256xf32> to vector<1x8x256xf32>
    %cst = arith.constant dense<0.000000e+00> : vector<1xf32>
    %3 = vector.multi_reduction <add>, %2, %cst [1, 2] : vector<1x8x256xf32> to vector<1xf32>
    %4 = vector.shape_cast %3 : vector<1xf32> to vector<1x1x1xf32>
    %5 = vector.extract %4[0, 0, 0] : f32 from vector<1x1x1xf32>
    %cst_2 = arith.constant 9.765625E-4 : f32
    %6 = arith.mulf %5, %cst_2 : f32
    %7 = vector.broadcast %6 : f32 to vector<8x256xf32>
    %8 = arith.subf %1, %7 : vector<8x256xf32>
    %9 = tpu.iota {dimensions = array<i32: 0>} : vector<8x256xi32>
    %c4_i32 = arith.constant 4 : i32
    %10 = vector.broadcast %c4_i32 : i32 to vector<8x256xi32>
    %11 = arith.cmpi slt, %9, %10 : vector<8x256xi32>
    %cst_3 = arith.constant 0.000000e+00 : f32
    %12 = vector.broadcast %cst_3 : f32 to vector<8x256xf32>
    %13 = arith.select %11, %8, %12 : vector<8x256xi1>, vector<8x256xf32>
    %14 = arith.mulf %13, %13 : vector<8x256xf32>
    %15 = vector.shape_cast %14 : vector<8x256xf32> to vector<1x8x256xf32>
    %cst_4 = arith.constant dense<0.000000e+00> : vector<1xf32>
    %16 = vector.multi_reduction <add>, %15, %cst_4 [1, 2] : vector<1x8x256xf32> to vector<1xf32>
    %17 = vector.shape_cast %16 : vector<1xf32> to vector<1x1x1xf32>
    %18 = vector.extract %17[0, 0, 0] : f32 from vector<1x1x1xf32>
    %cst_5 = arith.constant 9.765625E-4 : f32
    %19 = arith.mulf %18, %cst_5 : f32
    %cst_6 = arith.constant 9.99999974E-6 : f32
    %20 = arith.addf %19, %cst_6 : f32
    %21 = math.rsqrt %20 : f32
    %c0_7 = arith.constant 0 : index
    %c0_8 = arith.constant 0 : index
    %22 = vector.load %arg2[%c0_7, %c0_8] : memref<8x8xf32, #tpu.memory_space<vmem>>, vector<8x8xf32>
    %c0_9 = arith.constant 0 : index
    %c0_10 = arith.constant 0 : index
    %c0_11 = arith.constant 0 : index
    %23 = vector.load %arg1[%c0_9, %c0_10, %c0_11] : memref<1x8x256xf32, #tpu.memory_space<vmem>>, vector<1x8x256xf32>
    %24 = vector.shape_cast %23 : vector<1x8x256xf32> to vector<8x256xf32>
    %cst_12 = arith.constant dense<0.000000e+00> : vector<8x256xf32>
    %25 = tpu.matmul %22, %24, %cst_12 {dimension_numbers = #tpu.dot_dimension_numbers<[1], [0], [0], [1], [0, 0, 1, 1], [], []>} : vector<8x8xf32>, vector<8x256xf32>, vector<8x256xf32> -> vector<8x256xf32>
    %c0_13 = arith.constant 0 : index
    %c0_14 = arith.constant 0 : index
    %26 = vector.load %arg4[%c0_13, %c0_14] : memref<8x1xf32, #tpu.memory_space<vmem>>, vector<8x1xf32>
    %27 = arith.mulf %21, %6 : f32
    %c0_15 = arith.constant 0 : index
    %c0_16 = arith.constant 0 : index
    %28 = vector.load %arg3[%c0_15, %c0_16] : memref<8x1xf32, #tpu.memory_space<vmem>>, vector<8x1xf32>
    %29 = vector.broadcast %27 : f32 to vector<8x1xf32>
    %30 = arith.mulf %29, %28 : vector<8x1xf32>
    %31 = arith.subf %26, %30 : vector<8x1xf32>
    %32 = vector.broadcast %21 : f32 to vector<8x256xf32>
    %33 = arith.mulf %32, %25 : vector<8x256xf32>
    %34 = vector.broadcast %31 : vector<8x1xf32> to vector<8x256xf32>
    %35 = arith.addf %33, %34 : vector<8x256xf32>
    %c0_17 = arith.constant 0 : index
    %c0_18 = arith.constant 0 : index
    %c0_19 = arith.constant 0 : index
    %36 = vector.load %arg5[%c0_17, %c0_18, %c0_19] : memref<1x8x256xf32, #tpu.memory_space<vmem>>, vector<1x8x256xf32>
    %37 = vector.shape_cast %36 : vector<1x8x256xf32> to vector<8x256xf32>
    %38 = vector.shape_cast %35 : vector<8x256xf32> to vector<1x8x256xf32>
    tpu.vector_store %arg5[%c0_17, %c0_18, %c0_19], %38 {strides = array<i32>} : memref<1x8x256xf32, #tpu.memory_space<vmem>>, vector<1x8x256xf32>,
    return
  }
  func.func @transform_0(%arg0: i32) -> (i32, i32, i32) {
    %c0_i32 = arith.constant 0 : i32
    %c0_i32_0 = arith.constant 0 : i32
    %c0_i32_1 = arith.constant 0 : i32
    return %arg0, %c0_i32, %c0_i32_0 : i32, i32, i32
  }
  func.func @transform_1(%arg0: i32) -> (i32, i32) {
    %c0_i32 = arith.constant 0 : i32
    %c0_i32_0 = arith.constant 0 : i32
    %c0_i32_1 = arith.constant 0 : i32
    return %c0_i32, %c0_i32_0 : i32, i32
  }
  func.func @transform_2(%arg0: i32) -> (i32, i32) {
    %c0_i32 = arith.constant 0 : i32
    %c0_i32_0 = arith.constant 0 : i32
    %c0_i32_1 = arith.constant 0 : i32
    return %c0_i32, %c0_i32_0 : i32, i32
  }
  func.func @transform_3(%arg0: i32) -> (i32, i32) {
    %c0_i32 = arith.constant 0 : i32
    %c0_i32_0 = arith.constant 0 : i32
    %c0_i32_1 = arith.constant 0 : i32
    return %c0_i32, %c0_i32_0 : i32, i32
  }
  func.func @transform_4(%arg0: i32) -> (i32, i32, i32) {
    %c0_i32 = arith.constant 0 : i32
    %c0_i32_0 = arith.constant 0 : i32
    %c0_i32_1 = arith.constant 0 : i32
    return %arg0, %c0_i32, %c0_i32_0 : i32, i32, i32
  }
}

</mosaic_0001>

<llo_original>
// kernel: tpu_custom_call.1
$region0: #{tpu_custom_call.1}
  #allocation0 [shape = 'u32[]', space=smem, size = 0x4, offset = 0x4, fixed_abs, tag = 'smem constant byte address 0x4 - core index']
  #allocation1 [shape = 'u32[144,128]{1,0:T(1,128)}', space=vmem, size = 0x12000, scoped, tag = 'internal scratch']
  %s0 = inlined_call_operand.hbm [shape: f32[2,8,256], index: 0, kind: input, shape index: {}]
  %s1 = inlined_call_operand.vmem [shape: f32[8,8], index: 1, kind: input, shape index: {}]
  %s2 = inlined_call_operand.vmem [shape: f32[8,1], index: 2, kind: input, shape index: {}]
  %s3 = inlined_call_operand.vmem [shape: f32[8,1], index: 3, kind: input, shape index: {}]
  %s4 = inlined_call_operand.hbm [shape: f32[2,8,256], index: 4, kind: output, shape index: {}]
  %s5 = sld [smem:[#allocation0]]
  $region53: #{tpu_custom_call.1} parent=0
    _
  %s7 = ssub.s32 1, %s5
  %s8 = scalar_select 0, %s7, %s5
  $region1: #{tpu_custom_call.1} parent=0
    #allocation2 [shape = 'u8[16384]{0}', space=vmem, size = 0x4000, scoped, tag = 'input window, operand 0']
    #allocation3 [shape = 's32[2]{0}', space=sflag, size = 0x8, scoped, tag = 'scoped memory for tpu_custom_call.1']
    #allocation4 [shape = 's32[2]{0}', space=sflag, size = 0x8, scoped, tag = 'scoped memory for tpu_custom_call.1']
    #allocation5 [shape = 'u8[16384]{0}', space=vmem, size = 0x4000, scoped, tag = 'output window, operand 0']
    %9 = vsyncpa [#allocation3], 0
    %s10 = scalar_lea.sflag [#allocation3], 1
    %11 = vsyncpa %s10, 0
    %12 = vsyncpa [#allocation4], 0
    %s13 = scalar_lea.sflag [#allocation4], 1
    %14 = vsyncpa %s13, 0
    loop: start=0, step=1, limit=4
    $region2: #{tpu_custom_call.1} parent=1 // loop_pre_header
      _
    $region3: #{tpu_custom_call.1} parent=1 // loop_header
      %s16 = sphi 0, %s20
      %p17 = scmp.ge.s32.totalorder %s16, 4
      %s26 = sphi 0, %s28
      %s29 = sphi 0, %s26
      %s30 = sphi 0, %s29
      %s46 = sphi 0, %s30
      %s50 = sphi 0, %s50
      %s52 = sphi 0, %s50
      %s53 = sphi 0, %s52
      %s67 = sphi 0, %s53
      %s71 = sphi 0, %s71
      %s73 = sphi 0, %s71
      %s74 = sphi 0, %s73
      %s88 = sphi 0, %s74
      %s92 = sphi 0, %s92
      %s94 = sphi 0, %s92
      %s95 = sphi 0, %s94
      %s109 = sphi 0, %s95
      %s115 = sphi 0, %s117
      %s118 = sphi 0, %s115
      %s119 = sphi 0, %s118
      %s135 = sphi 0, %s119
    $region4: #{tpu_custom_call.1} parent=1 // loop_header_branch
      %19 = sbr.rel (%p17) target = $region8
    $region5: #{tpu_custom_call.1} parent=1 // loop_body
      %s21 = ssub.s32 %s16, 1
      %s22 = ssub.s32 %s16, 2
      %s23 = sadd.s32 %s16, 1
      %s24 = ssub.s32 %s16, %s23
      %p25 = scmp.eq.s32.totalorder %s24, 0
      %s27 = sadd.s32 %s26, 1
      %s28 = scalar_select %p25, %s26, %s27
      %p31 = pneg %p25
      %p32 = scmp.eq.s32.totalorder %s16, 1
      %p33 = por %p31, %p32
      %p34 = scmp.ne.s32.totalorder %s26, %s29
      %p35 = scmp.eq.s32.totalorder %s16, 0
      %p36 = por %p34, %p35
      %p37 = scmp.ne.s32.totalorder %s26, %s29
      %p38 = scmp.eq.s32.totalorder %s21, 1
      %p39 = por %p37, %p38
      %p40 = scmp.ne.s32.totalorder %s29, %s30
      %p41 = scmp.eq.s32.totalorder %s21, 0
      %p42 = por %p40, %p41
      %p43 = scmp.ne.s32.totalorder %s29, %s30
      %p44 = scmp.eq.s32.totalorder %s22, 1
      %p45 = por %p43, %p44
      %p47 = scmp.ne.s32.totalorder %s30, %s46
      %p48 = scmp.eq.s32.totalorder %s22, 0
      %p49 = por %p47, %p48
      %s51 = sadd.s32 %s50, 1
      %p54 = scmp.eq.s32.totalorder %s16, 1
      %p55 = scmp.ne.s32.totalorder %s50, %s52
      %p56 = scmp.eq.s32.totalorder %s16, 0
      %p57 = por %p55, %p56
      %p58 = scmp.ne.s32.totalorder %s50, %s52
      %p59 = scmp.eq.s32.totalorder %s21, 1
      %p60 = por %p58, %p59
      %p61 = scmp.ne.s32.totalorder %s52, %s53
      %p62 = scmp.eq.s32.totalorder %s21, 0
      %p63 = por %p61, %p62
      %p64 = scmp.ne.s32.totalorder %s52, %s53
      %p65 = scmp.eq.s32.totalorder %s22, 1
      %p66 = por %p64, %p65
      %p68 = scmp.ne.s32.totalorder %s53, %s67
      %p69 = scmp.eq.s32.totalorder %s22, 0
      %p70 = por %p68, %p69
      %s72 = sadd.s32 %s71, 1
      %p75 = scmp.eq.s32.totalorder %s16, 1
      %p76 = scmp.ne.s32.totalorder %s71, %s73
      %p77 = scmp.eq.s32.totalorder %s16, 0
      %p78 = por %p76, %p77
      %p79 = scmp.ne.s32.totalorder %s71, %s73
      %p80 = scmp.eq.s32.totalorder %s21, 1
      %p81 = por %p79, %p80
      %p82 = scmp.ne.s32.totalorder %s73, %s74
      %p83 = scmp.eq.s32.totalorder %s21, 0
      %p84 = por %p82, %p83
      %p85 = scmp.ne.s32.totalorder %s73, %s74
      %p86 = scmp.eq.s32.totalorder %s22, 1
      %p87 = por %p85, %p86
      %p89 = scmp.ne.s32.totalorder %s74, %s88
      %p90 = scmp.eq.s32.totalorder %s22, 0
      %p91 = por %p89, %p90
      %s93 = sadd.s32 %s92, 1
      %p96 = scmp.eq.s32.totalorder %s16, 1
      %p97 = scmp.ne.s32.totalorder %s92, %s94
      %p98 = scmp.eq.s32.totalorder %s16, 0
      %p99 = por %p97, %p98
      %p100 = scmp.ne.s32.totalorder %s92, %s94
      %p101 = scmp.eq.s32.totalorder %s21, 1
      %p102 = por %p100, %p101
      %p103 = scmp.ne.s32.totalorder %s94, %s95
      %p104 = scmp.eq.s32.totalorder %s21, 0
      %p105 = por %p103, %p104
      %p106 = scmp.ne.s32.totalorder %s94, %s95
      %p107 = scmp.eq.s32.totalorder %s22, 1
      %p108 = por %p106, %p107
      %p110 = scmp.ne.s32.totalorder %s95, %s109
      %p111 = scmp.eq.s32.totalorder %s22, 0
      %p112 = por %p110, %p111
      %s113 = ssub.s32 %s16, %s23
      %p114 = scmp.eq.s32.totalorder %s113, 0
      %s116 = sadd.s32 %s115, 1
      %s117 = scalar_select %p114, %s115, %s116
      %p120 = pneg %p114
      %p121 = scmp.eq.s32.totalorder %s16, 1
      %p122 = por %p120, %p121
      %p123 = scmp.ne.s32.totalorder %s115, %s118
      %p124 = scmp.eq.s32.totalorder %s16, 0
      %p125 = por %p123, %p124
      %p126 = scmp.ne.s32.totalorder %s115, %s118
      %p127 = scmp.eq.s32.totalorder %s21, 1
      %p128 = por %p126, %p127
      %p129 = scmp.ne.s32.totalorder %s118, %s119
      %p130 = scmp.eq.s32.totalorder %s21, 0
      %p131 = por %p129, %p130
      %p132 = scmp.ne.s32.totalorder %s118, %s119
      %p133 = scmp.eq.s32.totalorder %s22, 1
      %p134 = por %p132, %p133
      %p136 = scmp.ne.s32.totalorder %s119, %s135
      %p137 = scmp.eq.s32.totalorder %s22, 0
      %p138 = por %p136, %p137
      %p139 = scmp.le.s32.totalorder 1, %s16
      %p140 = scmp.lt.s32.totalorder %s16, 3
      %p141 = pnand %p139, %p140
      %p142 = pneg %p141
      // Predicated region
      $region9: #{tpu_custom_call.1} parent=5 // pred_check
        _
      $region10: #{tpu_custom_call.1} parent=5 // pred_check_branch
        %144 = sbr.rel (%p141) target = $region12
      $region11: #{tpu_custom_call.1} parent=5 // pred_region
        %s145 = ssub.s32 %s16, 1
        // Predicated region
        $region13: #{tpu_custom_call.1} parent=11 // pred_check
          %p146 = pneg %p63
        $region14: #{tpu_custom_call.1} parent=11 // pred_check_branch
          %148 = sbr.rel (%p146) target = $region16
        $region15: #{tpu_custom_call.1} parent=11 // pred_region
          _
        $region16: #{tpu_custom_call.1} parent=11 // pred_fallthru
          _
        // Predicated region
        $region17: #{tpu_custom_call.1} parent=11 // pred_check
          %p149 = pneg %p84
        $region18: #{tpu_custom_call.1} parent=11 // pred_check_branch
          %151 = sbr.rel (%p149) target = $region20
        $region19: #{tpu_custom_call.1} parent=11 // pred_region
          _
        $region20: #{tpu_custom_call.1} parent=11 // pred_fallthru
          _
        // Predicated region
        $region21: #{tpu_custom_call.1} parent=11 // pred_check
          %p152 = pneg %p105
        $region22: #{tpu_custom_call.1} parent=11 // pred_check_branch
          %154 = sbr.rel (%p152) target = $region24
        $region23: #{tpu_custom_call.1} parent=11 // pred_region
          _
        $region24: #{tpu_custom_call.1} parent=11 // pred_fallthru
          _
      $region12: #{tpu_custom_call.1} parent=5 // pred_fallthru
        _
      %p155 = scmp.lt.s32.totalorder %s16, 2
      // Predicated region
      $region25: #{tpu_custom_call.1} parent=5 // pred_check
        %p156 = pneg %p155
      $region26: #{tpu_custom_call.1} parent=5 // pred_check_branch
        %158 = sbr.rel (%p156) target = $region28
      $region27: #{tpu_custom_call.1} parent=5 // pred_region
        // Predicated region
        $region29: #{tpu_custom_call.1} parent=27 // pred_check
          %p159 = pneg %p36
        $region30: #{tpu_custom_call.1} parent=27 // pred_check_branch
          %161 = sbr.rel (%p159) target = $region32
        $region31: #{tpu_custom_call.1} parent=27 // pred_region
          %s162 = sand.u32 %s26, 1
          %s163 = scalar_lea.sflag [#allocation3], %s162
          %s164 = sand.u32 %s26, 1
          %s165 = smul.addr %s164, 16
          %s166 = scalar_lea.vmem [#allocation2], %s165
          %s168 = ssub.s32 256, 256
          %169 = vsyncadd %s163, %s168
          %s170 = smul.addr %s16, 2
          %s171 = smul.addr %s170, 128
          %s172 = scalar_lea.hbm %s0, %s171
          %s174 = sshll.u32 %s166, 4
          %s175 = int_to_ptr.vmem [resolvable:$true] %s174
          %177 = dma.hbm_to_vmem [thread:$0]  %s172, 256, %s175, %s163
        $region32: #{tpu_custom_call.1} parent=27 // pred_fallthru
          _
      $region28: #{tpu_custom_call.1} parent=5 // pred_fallthru
        _
      %p178 = scmp.le.s32.totalorder 1, %s16
      %p179 = scmp.lt.s32.totalorder %s16, 3
      %p180 = pnand %p178, %p179
      %p181 = pneg %p180
      // Predicated region
      $region33: #{tpu_custom_call.1} parent=5 // pred_check
        _
      $region34: #{tpu_custom_call.1} parent=5 // pred_check_branch
        %183 = sbr.rel (%p180) target = $region36
      $region35: #{tpu_custom_call.1} parent=5 // pred_region
        %s184 = ssub.s32 %s16, 1
        %s185 = sand.u32 %s29, 1
        %s186 = scalar_lea.sflag [#allocation3], %s185
        %s187 = sand.u32 %s29, 1
        %s188 = smul.addr %s187, 16
        %s189 = scalar_lea.vmem [#allocation2], %s188
        // Predicated region
        $region37: #{tpu_custom_call.1} parent=35 // pred_check
          %p190 = pneg %p42
        $region38: #{tpu_custom_call.1} parent=35 // pred_check_branch
          %192 = sbr.rel (%p190) target = $region40
        $region39: #{tpu_custom_call.1} parent=35 // pred_region
          %193 = dma.done %s186, 256
        $region40: #{tpu_custom_call.1} parent=35 // pred_fallthru
          _
        %s194 = sand.u32 %s29, 1
        %s195 = scalar_lea.sflag [#allocation3], %s194
        %s196 = sand.u32 %s29, 1
        %s197 = smul.addr %s196, 16
        %s198 = scalar_lea.vmem [#allocation2], %s197
        %p199 = pneg %p42
        %p200 = pneg %p39
        %p201 = pneg %p63
        %p202 = pneg %p60
        %p203 = pneg %p84
        %p204 = pneg %p81
        %p205 = pneg %p105
        %p206 = pneg %p102
        %p207 = pneg %p131
        %p208 = pneg %p128
        %s209 = sand.u32 %s118, 1
        %s210 = scalar_lea.sflag [#allocation4], %s209
        %s211 = sand.u32 %s118, 1
        %s212 = smul.addr %s211, 16
        %s213 = scalar_lea.vmem [#allocation5], %s212
        %v214 = vld [vmem:[%s189] sm:$0xff]
        %v215 = vld [vmem:[%s189 + $0x8] sm:$0xff]
        %v216 = vadd.f32 %v214, %v215
        %217 = vadd.xlane.f32.xlu0 %v216
        %v218 = vpop.xlane.xlu0 %217
        %v219 = vrot.slane %v218, 4
        %v220 = vadd.f32 %v218, %v219
        %v221 = vrot.slane %v220, 2
        %v222 = vadd.f32 %v220, %v221
        %v223 = vrot.slane %v222, 1
        %v224 = vadd.f32 %v222, %v223
        %s225 = vtos %v224
        %s226 = smul.f32 %s225, 0.0009765625
        %v227 = vstv %s226
        %v228 = vsub.f32 %v214, %v227
        %v229 = vsub.f32 %v215, %v227
        %v230 = vlaneseq
        %v231 = vshrl.u32 %v230, 7
        %vm232 = vcmp.lt.s32.totalorder %v231, 4
        %v233 = vsel %vm232, %v228, 0.0
        %v234 = vsel %vm232, %v229, 0.0
        %v235 = vmul.f32 %v233, %v233
        %v236 = vmul.f32 %v234, %v234
        %v237 = vadd.f32 %v235, %v236
        %238 = vadd.xlane.f32.xlu0 %v237
        %v239 = vpop.xlane.xlu0 %238
        %v240 = vrot.slane %v239, 4
        %v241 = vadd.f32 %v239, %v240
        %v242 = vrot.slane %v241, 2
        %v243 = vadd.f32 %v241, %v242
        %v244 = vrot.slane %v243, 1
        %v245 = vadd.f32 %v243, %v244
        %s246 = vtos %v245
        %s247 = smul.f32 %s246, 0.0009765625
        %s248 = sadd.f32 %s247, 1e-05
        %v249 = vstv %s248
        %v250 = vrsqrt.pop %v249
        %s251 = vtos %v250
        %v252 = vld [vmem:[%s1] sm:$0xff]
        %vm253 = vcmask 64512
        %v255 = vsel %vm253, %v252, 0
        %257 = vmatprep.subr.mxu0 %v215
        %258 = vmatpush1.msra.mxu0 %v214
        %259 = vmatprep.subr.mxu0 0.0
        %260 = vmatpush1.msra.mxu0 0.0
        %261 = vmatprep.subr.mxu0 0.0
        %262 = vmatpush1.msra.mxu0 0.0
        %263 = vmatprep.subr.mxu0 0.0
        %264 = vmatpush1.msra.mxu0 0.0
        %265 = vmatprep.subr.mxu0 0.0
        %266 = vmatpush1.msra.mxu0 0.0
        %267 = vmatprep.subr.mxu0 0.0
        %268 = vmatpush1.msra.mxu0 0.0
        %269 = vmatprep.subr.mxu0 0.0
        %270 = vmatpush1.msra.mxu0 0.0
        %271 = vmatprep.subr.mxu0 0.0
        %272 = vmatpush1.msra.mxu0 0.0
        %273 = vmatprep.subr.mxu0 0.0
        %274 = vmatpush1.msra.mxu0 0.0
        %275 = vmatprep.subr.mxu0 0.0
        %276 = vmatpush1.msra.mxu0 0.0
        %277 = vmatprep.subr.mxu0 0.0
        %278 = vmatpush1.msra.mxu0 0.0
        %279 = vmatprep.subr.mxu0 0.0
        %280 = vmatpush1.msra.mxu0 0.0
        %281 = vmatprep.subr.mxu0 0.0
        %282 = vmatpush1.msra.mxu0 0.0
        %283 = vmatprep.subr.mxu0 0.0
        %284 = vmatpush1.msra.mxu0 0.0
        %285 = vmatprep.subr.mxu0 0.0
        %286 = vmatpush1.msra.mxu0 0.0
        %287 = vmatprep.subr.mxu0 0.0
        %288 = vmatpush1.msra.mxu0 0.0
        %289 = vmatprep.subr.mxu0 0.0
        %290 = vmatpush1.msra.mxu0 0.0
        %291 = vmatprep.subr.mxu0 0.0
        %292 = vmatpush1.msra.mxu0 0.0
        %293 = vmatprep.subr.mxu0 0.0
        %294 = vmatpush1.msra.mxu0 0.0
        %295 = vmatprep.subr.mxu0 0.0
        %296 = vmatpush1.msra.mxu0 0.0
        %297 = vmatprep.subr.mxu0 0.0
        %298 = vmatpush1.msra.mxu0 0.0
        %299 = vmatprep.subr.mxu0 0.0
        %300 = vmatpush1.msra.mxu0 0.0
        %301 = vmatprep.subr.mxu0 0.0
        %302 = vmatpush1.msra.mxu0 0.0
        %303 = vmatprep.subr.mxu0 0.0
        %304 = vmatpush1.msra.mxu0 0.0
        %305 = vmatprep.subr.mxu0 0.0
        %306 = vmatpush1.msra.mxu0 0.0
        %307 = vmatprep.subr.mxu0 0.0
        %308 = vmatpush1.msra.mxu0 0.0
        %309 = vmatprep.subr.mxu0 0.0
        %310 = vmatpush1.msra.mxu0 0.0
        %311 = vmatprep.subr.mxu0 0.0
        %312 = vmatpush1.msra.mxu0 0.0
        %313 = vmatprep.subr.mxu0 0.0
        %314 = vmatpush1.msra.mxu0 0.0
        %315 = vmatprep.subr.mxu0 0.0
        %316 = vmatpush1.msra.mxu0 0.0
        %317 = vmatprep.subr.mxu0 0.0
        %318 = vmatpush1.msra.mxu0 0.0
        %319 = vmatprep.subr.mxu0 0.0
        %320 = vmatpush1.msra.mxu0 0.0
        %321 = vmatprep.mubr.f32.mxu0 0.0
        %322 = vmatmul.mubr.f32.gmra.mrb[0].mxu0 %v255
        %v323 = vpop.f32.mrb[0].mxu0
        %v324 = vadd.f32 0.0, %v323
        %v325 = vpop.f32.mrb[0].mxu0
        %v326 = vadd.f32 0.0, %v325
        %327 = vdwg.mxu0
        %v328 = vld [vmem:[%s3] sm:$0xff]
        %s329 = smul.f32 %s251, %s226
        %v330 = vld [vmem:[%s2] sm:$0xff]
        %v331 = vstv %s329
        %v332 = vmul.f32 %v331, %v330
        %v333 = vsub.f32 %v328, %v332
        %v334 = vstv %s251
        %v335 = vmul.f32 %v334, %v324
        %v336 = vmul.f32 %v334, %v326
        %338 = vset.pattern.permute.xlu0 0
        %339 = vperm.xlu0 %338, %v333
        %v340 = vpop.permute.xlu0 %339
        %v342 = vadd.f32 %v335, %v340
        %v343 = vadd.f32 %v336, %v340
        %344 = vst [vmem:[%s213] sm:$0xff] %v342
        %345 = vst [vmem:[%s213 + $0x8] sm:$0xff] %v343
        %s346 = sand.u32 %s118, 1
        %s347 = scalar_lea.sflag [#allocation4], %s346
        %s348 = sand.u32 %s118, 1
        %s349 = smul.addr %s348, 16
        %s350 = scalar_lea.vmem [#allocation5], %s349
        // Predicated region
        $region41: #{tpu_custom_call.1} parent=35 // pred_check
          %p351 = pneg %p128
        $region42: #{tpu_custom_call.1} parent=35 // pred_check_branch
          %353 = sbr.rel (%p351) target = $region44
        $region43: #{tpu_custom_call.1} parent=35 // pred_region
          %s355 = ssub.s32 256, 256
          %356 = vsyncadd %s347, %s355
          %s357 = smul.addr %s21, 2
          %s358 = smul.addr %s357, 128
          %s359 = scalar_lea.hbm %s4, %s358
          %s361 = sshll.u32 %s350, 4
          %s362 = int_to_ptr.vmem [resolvable:$true] %s361
          %364 = dma.vmem_to_hbm [thread:$0]  %s362, 256, %s359, %s347
        $region44: #{tpu_custom_call.1} parent=35 // pred_fallthru
          _
      $region36: #{tpu_custom_call.1} parent=5 // pred_fallthru
        _
      %p365 = scmp.le.s32.totalorder 2, %s16
      // Predicated region
      $region45: #{tpu_custom_call.1} parent=5 // pred_check
        %p366 = pneg %p365
      $region46: #{tpu_custom_call.1} parent=5 // pred_check_branch
        %368 = sbr.rel (%p366) target = $region48
      $region47: #{tpu_custom_call.1} parent=5 // pred_region
        %s369 = ssub.s32 %s16, 2
        // Predicated region
        $region49: #{tpu_custom_call.1} parent=47 // pred_check
          %p370 = pneg %p134
        $region50: #{tpu_custom_call.1} parent=47 // pred_check_branch
          %372 = sbr.rel (%p370) target = $region52
        $region51: #{tpu_custom_call.1} parent=47 // pred_region
          %s373 = sand.u32 %s119, 1
          %s374 = scalar_lea.sflag [#allocation4], %s373
          %s375 = sand.u32 %s119, 1
          %s376 = smul.addr %s375, 16
          %s377 = scalar_lea.vmem [#allocation5], %s376
          %378 = dma.done %s374, 256
        $region52: #{tpu_custom_call.1} parent=47 // pred_fallthru
          _
      $region48: #{tpu_custom_call.1} parent=5 // pred_fallthru
        _
    $region6: #{tpu_custom_call.1} parent=1 // loop_footer
      %s20 = sadd.s32 1, %s16
    $region7: #{tpu_custom_call.1} parent=1 // loop_footer_branch
      %15 = sbr.rel target = $region3
    $region8: #{tpu_custom_call.1} parent=1 // loop_exit
      _
    %379 = vsyncpa [#allocation3], 1
    %s380 = scalar_lea.sflag [#allocation3], 1
    %381 = vsyncpa %s380, 1
    %382 = vsyncpa [#allocation4], 1
    %s383 = scalar_lea.sflag [#allocation4], 1
    %384 = vsyncpa %s383, 1

</llo_original>
